<compile_context>
chip_gen: v7x
topology: tpu7x:2x2x1
jax: 0.10.0
libtpu: 0.0.40
codegen_flags: <defaults>
</compile_context>

<pallas_src>
import functools

import jax
import jax.numpy as jnp
import numpy as np
from jax.experimental import pallas as pl
from jax.experimental.pallas import tpu as pltpu

_UNROLL_ROWS = 32                            # unroll row loop below this
_FAST_PATH_VMEM_BUDGET = 8 * 1024 * 1024     # conservative vs v5e 16 MiB scoped


def _round_up(x, m):
    return (x + m - 1) // m * m


def _foreach_row(rows, body):
    """body(b) for b in [0, rows); statically unrolled when small."""
    if rows <= _UNROLL_ROWS:
        for b in range(rows):
            body(b)
    else:
        @pl.loop(0, rows)
        def _(b):
            body(b)


def _gather_vmem_kernel(idx_ref, table_ref, out_ref, *, rows, b_stride):
    """Fast path: per-camera packed (HW, NC+F) table is VMEM-resident
    (streamed by BlockSpec); gather rows with dynamic VMEM loads."""
    c = pl.program_id(0)
    bb = pl.program_id(1)
    base = c * b_stride + bb * rows

    def body(b):
        ridx = idx_ref[base + b]                         # local row in [0, HW)
        out_ref[0, pl.ds(b, 1), :] = table_ref[0, pl.ds(ridx, 1), :]

    _foreach_row(rows, body)


def _gather_dma_kernel(idx_ref, table_hbm, out_ref, sem, *, rows, b_stride, hw):
    """DMA path: packed row table stays in HBM; one row DMA per point, all
    started against one shared semaphore before any wait (full overlap)."""
    c = pl.program_id(0)
    bb = pl.program_id(1)
    base = c * b_stride + bb * rows

    def start_one(b):
        ridx = c * hw + idx_ref[base + b]                # global row in table
        pltpu.make_async_copy(
            table_hbm.at[pl.ds(ridx, 1), :],             # (1, NC+F) row in HBM
            out_ref.at[0, pl.ds(b, 1), :],               # lands in output block
            sem.at[0]).start()

    _foreach_row(rows, start_one)

    def wait_one(b):
        # Same-shape descriptor against the shared sem: each wait retires one
        # row's worth of bytes; completion order doesn't matter.
        pltpu.make_async_copy(
            table_hbm.at[pl.ds(0, 1), :],
            out_ref.at[0, pl.ds(0, 1), :],
            sem.at[0]).wait()

    _foreach_row(rows, wait_one)


def projector_forward(M, positions, images, features, *,
                      block_rows=512, force_path=None):
    """M: [C,3,4], positions: [B,3], images: [C,H,W,NC], features: [C,H,W,F].

    Returns (fetched [B,C,NC], feats [B,C,F], masks [B,C]), matching
    Projector.fetch_corresponding_pixels.
    """
    C, H, W, NC = images.shape
    F = features.shape[-1]
    B = positions.shape[0]
    HW = H * W
    NCF = NC + F

    # --- tiny projection / mask math (C*B*3 work) in plain JAX -------------
    homo = jnp.concatenate(
        [positions, jnp.ones((B, 1), positions.dtype)], axis=1)         # (B,4)
    ic = jnp.einsum('cij,bj->cbi', M.astype(jnp.float32),
                    homo.astype(jnp.float32))                           # (C,B,3)
    ic = ic / ic[..., -1:]              # NOTE: w==0 -> inf, same as reference
    ici = ic.astype(jnp.int32)          # trunc toward 0 (== torch .long())
    c0, c1 = ici[..., 0], ici[..., 1]
    mask = (c0 >= 0) & (c1 >= 0) & (c1 < W) & (c0 < H)                   # (C,B)
    c0 = jnp.where(mask, c0, 0)
    c1 = jnp.where(mask, c1, 0)
    local_idx = (c0 * W + c1).astype(jnp.int32)                          # (C,B)

    # --- pack pixels + features into one row table (one read per point) ----
    # TODO(synk): precompute `table` once outside if images/features are
    # reused across many forward() calls.
    out_dtype = jnp.result_type(images.dtype, features.dtype)
    table = jnp.concatenate(
        [images.reshape(C, HW, NC).astype(out_dtype),
         features.reshape(C, HW, F).astype(out_dtype)], axis=-1)     # (C,HW,NCF)

    # --- B tiling: bounds output-block VMEM and in-flight DMAs -------------
    tb = min(_round_up(B, 8), _round_up(block_rows, 8))
    b_pad = _round_up(B, tb)
    nb = b_pad // tb
    if b_pad != B:
        local_idx = jnp.pad(local_idx, ((0, 0), (0, b_pad - B)))
    flat_idx = local_idx.reshape(C * b_pad)

    # --- choose gather path by VMEM footprint -------------------------------
    lanes = _round_up(NCF, 128)
    dsize = jnp.dtype(out_dtype).itemsize
    fast_bytes = 2 * HW * lanes * dsize + 2 * tb * lanes * dsize  # dbl-buffered
    use_vmem = (force_path == "vmem") or (
        force_path is None and fast_bytes <= _FAST_PATH_VMEM_BUDGET)

    out_shape = jax.ShapeDtypeStruct((C, b_pad, NCF), out_dtype)
    out_spec = pl.BlockSpec((1, tb, NCF), lambda c, bb, idx: (c, bb, 0))
    cparams = pltpu.CompilerParams(
        dimension_semantics=("parallel", "parallel"))

    if use_vmem:
        packed = pl.pallas_call(
            functools.partial(_gather_vmem_kernel, rows=tb, b_stride=b_pad),
            out_shape=out_shape,
            grid_spec=pltpu.PrefetchScalarGridSpec(
                num_scalar_prefetch=1,                   # flat_idx -> SMEM
                grid=(C, nb),
                in_specs=[pl.BlockSpec((1, HW, NCF),
                                       lambda c, bb, idx: (c, 0, 0))],
                out_specs=out_spec,
            ),
            compiler_params=cparams,
        )(flat_idx, table)
    else:
        packed = pl.pallas_call(
            functools.partial(_gather_dma_kernel, rows=tb, b_stride=b_pad,
                              hw=HW),
            out_shape=out_shape,
            grid_spec=pltpu.PrefetchScalarGridSpec(
                num_scalar_prefetch=1,                   # flat_idx -> SMEM
                grid=(C, nb),
                in_specs=[pl.BlockSpec(memory_space=pl.ANY)],   # table in HBM
                out_specs=out_spec,
                scratch_shapes=[pltpu.SemaphoreType.DMA((1,))],
            ),
            compiler_params=cparams,
        )(flat_idx, table.reshape(C * HW, NCF))

    packed = packed[:, :B, :]
    fetched = jnp.transpose(packed[..., :NC], (1, 0, 2)).astype(images.dtype)
    feats = jnp.transpose(packed[..., NC:], (1, 0, 2)).astype(features.dtype)
    masks = mask.T                                       # (B, C) bool
    return fetched, feats, masks


def build_projection_matrices(c2ws_34, fx, fy, cx, cy):
    """Replicates Projector.__init__ / _build_intrinsic_matrix (glue, plain JAX)."""
    C = c2ws_34.shape[0]
    bottom = jnp.tile(jnp.array([[[0.0, 0.0, 0.0, 1.0]]], dtype=jnp.float32),
                      (C, 1, 1))
    c2ws = jnp.concatenate([c2ws_34, bottom], axis=1)    # (C, 4, 4)
    w2cs = jnp.linalg.inv(c2ws)
    intr = jnp.zeros((C, 3, 4), dtype=jnp.float32)
    intr = intr.at[:, 0, 0].set(-fx)
    intr = intr.at[:, 1, 1].set(fy)
    intr = intr.at[:, 2, 2].set(1.0)
    intr = intr.at[:, 0, 2].set(cx)
    intr = intr.at[:, 1, 2].set(cy)
    return jnp.einsum('cij,cjk->cik', intr, w2cs)


def reference_forward(M, positions, images, features, H, W):
    """Pure-JAX reference mirroring the PyTorch code, for verification."""
    B = positions.shape[0]
    C = images.shape[0]
    homo = jnp.concatenate([positions, jnp.ones((B, 1), positions.dtype)], axis=1)
    ic = jnp.einsum('cij,bj->cbi', M, homo)
    ic = ic / ic[..., -1:]
    ici = ic.astype(jnp.int32)
    c0, c1 = ici[..., 0], ici[..., 1]
    mask = (c0 >= 0) & (c1 >= 0) & (c1 < W) & (c0 < H)
    c0 = jnp.where(mask, c0, 0)
    c1 = jnp.where(mask, c1, 0)
    cam = jnp.arange(C)[:, None]
    fetched = images[cam, c0, c1]                        # (C, B, NC)
    feats = features[cam, c0, c1]                        # (C, B, F)
    return (jnp.transpose(fetched, (1, 0, 2)),
            jnp.transpose(feats, (1, 0, 2)),
            mask.T)


if __name__ == "__main__":
    key = jax.random.PRNGKey(0)
    k_t, k_pos, k_img, k_feat = jax.random.split(key, 4)

    C, H, W, F, B = 4, 16, 16, 8, 8
    fx = fy = 20.0
    cx = cy = 8.0

    # Deterministic camera-to-world matrices: small rotations about y + translation.
    angles = jnp.arange(C, dtype=jnp.float32) * 0.2
    ca, sa = jnp.cos(angles), jnp.sin(angles)
    zeros, ones = jnp.zeros_like(ca), jnp.ones_like(ca)
    R = jnp.stack([
        jnp.stack([ca, zeros, sa], axis=-1),
        jnp.stack([zeros, ones, zeros], axis=-1),
        jnp.stack([-sa, zeros, ca], axis=-1),
    ], axis=1)                                           # (C, 3, 3)
    t = jnp.stack([
        0.1 * jnp.arange(C, dtype=jnp.float32),
        0.05 * jnp.arange(C, dtype=jnp.float32),
        4.0 + 0.2 * jnp.arange(C, dtype=jnp.float32),
    ], axis=-1) + 0.05 * jax.random.normal(k_t, (C, 3))
    c2ws_34 = jnp.concatenate([R, t[..., None]], axis=-1)   # (C, 3, 4)

    M = build_projection_matrices(c2ws_34, fx, fy, cx, cy)  # (C, 3, 4)

    positions = jax.random.uniform(k_pos, (B, 3), minval=-1.0, maxval=1.0,
                                   dtype=jnp.float32)
    images = jax.random.uniform(k_img, (C, H, W, 3), dtype=jnp.float32)
    features = jax.random.normal(k_feat, (C, H, W, F), dtype=jnp.float32)

    ref_fetched, ref_feats, ref_masks = reference_forward(
        M, positions, images, features, H, W)

    # Exercise both gather paths (VMEM-resident fast path + HBM DMA path).
    for path in ("vmem", "dma"):
        fetched, feats, masks = projector_forward(
            M, positions, images, features, force_path=path)
        jax.block_until_ready((fetched, feats, masks))
        np.testing.assert_allclose(np.asarray(fetched), np.asarray(ref_fetched),
                                   rtol=1e-6, atol=1e-6)
        np.testing.assert_allclose(np.asarray(feats), np.asarray(ref_feats),
                                   rtol=1e-6, atol=1e-6)
        np.testing.assert_array_equal(np.asarray(masks), np.asarray(ref_masks))

    # TODO(synk): fetch_corresponding_patches / extract_patch helpers and the
    # get_relative_directions utilities are not part of forward() and are left
    # unimplemented.
    print("KERNEL_OK")
</pallas_src>

<mosaic_0001>
module attributes {stable_mosaic.version = 11 : i64} {
  func.func @_gather_vmem_kernel(%arg0: i32, %arg1: i32, %arg2: memref<32xi32, #tpu.memory_space<smem>>, %arg3: memref<1x256x11xf32, #tpu.memory_space<vmem>>, %arg4: memref<1x8x11xf32, #tpu.memory_space<vmem>>) attributes {dimension_semantics = [#tpu.dimension_semantics<parallel>, #tpu.dimension_semantics<parallel>], iteration_bounds = array<i64: 4, 1>, scalar_prefetch = 1 : i64, scratch_operands = 0 : i64, tpu.core_type = #tpu.core_type<tc>, window_params = [{transform_indices = @transform_0, window_bounds = array<i64: 1, 256, 11>}, {transform_indices = @transform_1, window_bounds = array<i64: 1, 8, 11>}]} {
    %c8_i32 = arith.constant 8 : i32
    %0 = arith.muli %arg0, %c8_i32 : i32
    %c8_i32_0 = arith.constant 8 : i32
    %1 = arith.muli %arg1, %c8_i32_0 : i32
    %2 = arith.addi %0, %1 : i32
    %c0_i32 = arith.constant 0 : i32
    %3 = arith.addi %2, %c0_i32 : i32
    %4 = arith.index_cast %3 : i32 to index
    %5 = memref.load %arg2[%4] : memref<32xi32, #tpu.memory_space<smem>>
    %c0 = arith.constant 0 : index
    %6 = arith.index_cast %5 : i32 to index
    %c0_1 = arith.constant 0 : index
    %7 = vector.load %arg3[%c0, %6, %c0_1] : memref<1x256x11xf32, #tpu.memory_space<vmem>>, vector<1x1x11xf32>
    %8 = vector.shape_cast %7 : vector<1x1x11xf32> to vector<1x11xf32>
    %c0_2 = arith.constant 0 : index
    %c0_3 = arith.constant 0 : index
    %c0_4 = arith.constant 0 : index
    %9 = vector.load %arg4[%c0_2, %c0_3, %c0_4] : memref<1x8x11xf32, #tpu.memory_space<vmem>>, vector<1x1x11xf32>
    %10 = vector.shape_cast %9 : vector<1x1x11xf32> to vector<1x11xf32>
    %11 = vector.shape_cast %8 : vector<1x11xf32> to vector<1x1x11xf32>
    tpu.vector_store %arg4[%c0_2, %c0_3, %c0_4], %11 {strides = array<i32>} : memref<1x8x11xf32, #tpu.memory_space<vmem>>, vector<1x1x11xf32>,
    %c1_i32 = arith.constant 1 : i32
    %12 = arith.addi %2, %c1_i32 : i32
    %13 = arith.index_cast %12 : i32 to index
    %14 = memref.load %arg2[%13] : memref<32xi32, #tpu.memory_space<smem>>
    %c0_5 = arith.constant 0 : index
    %15 = arith.index_cast %14 : i32 to index
    %c0_6 = arith.constant 0 : index
    %16 = vector.load %arg3[%c0_5, %15, %c0_6] : memref<1x256x11xf32, #tpu.memory_space<vmem>>, vector<1x1x11xf32>
    %17 = vector.shape_cast %16 : vector<1x1x11xf32> to vector<1x11xf32>
    %c0_7 = arith.constant 0 : index
    %c1 = arith.constant 1 : index
    %c0_8 = arith.constant 0 : index
    %18 = vector.load %arg4[%c0_7, %c1, %c0_8] : memref<1x8x11xf32, #tpu.memory_space<vmem>>, vector<1x1x11xf32>
    %19 = vector.shape_cast %18 : vector<1x1x11xf32> to vector<1x11xf32>
    %20 = vector.shape_cast %17 : vector<1x11xf32> to vector<1x1x11xf32>
    tpu.vector_store %arg4[%c0_7, %c1, %c0_8], %20 {strides = array<i32>} : memref<1x8x11xf32, #tpu.memory_space<vmem>>, vector<1x1x11xf32>,
    %c2_i32 = arith.constant 2 : i32
    %21 = arith.addi %2, %c2_i32 : i32
    %22 = arith.index_cast %21 : i32 to index
    %23 = memref.load %arg2[%22] : memref<32xi32, #tpu.memory_space<smem>>
    %c0_9 = arith.constant 0 : index
    %24 = arith.index_cast %23 : i32 to index
    %c0_10 = arith.constant 0 : index
    %25 = vector.load %arg3[%c0_9, %24, %c0_10] : memref<1x256x11xf32, #tpu.memory_space<vmem>>, vector<1x1x11xf32>
    %26 = vector.shape_cast %25 : vector<1x1x11xf32> to vector<1x11xf32>
    %c0_11 = arith.constant 0 : index
    %c2 = arith.constant 2 : index
    %c0_12 = arith.constant 0 : index
    %27 = vector.load %arg4[%c0_11, %c2, %c0_12] : memref<1x8x11xf32, #tpu.memory_space<vmem>>, vector<1x1x11xf32>
    %28 = vector.shape_cast %27 : vector<1x1x11xf32> to vector<1x11xf32>
    %29 = vector.shape_cast %26 : vector<1x11xf32> to vector<1x1x11xf32>
    tpu.vector_store %arg4[%c0_11, %c2, %c0_12], %29 {strides = array<i32>} : memref<1x8x11xf32, #tpu.memory_space<vmem>>, vector<1x1x11xf32>,
    %c3_i32 = arith.constant 3 : i32
    %30 = arith.addi %2, %c3_i32 : i32
    %31 = arith.index_cast %30 : i32 to index
    %32 = memref.load %arg2[%31] : memref<32xi32, #tpu.memory_space<smem>>
    %c0_13 = arith.constant 0 : index
    %33 = arith.index_cast %32 : i32 to index
    %c0_14 = arith.constant 0 : index
    %34 = vector.load %arg3[%c0_13, %33, %c0_14] : memref<1x256x11xf32, #tpu.memory_space<vmem>>, vector<1x1x11xf32>
    %35 = vector.shape_cast %34 : vector<1x1x11xf32> to vector<1x11xf32>
    %c0_15 = arith.constant 0 : index
    %c3 = arith.constant 3 : index
    %c0_16 = arith.constant 0 : index
    %36 = vector.load %arg4[%c0_15, %c3, %c0_16] : memref<1x8x11xf32, #tpu.memory_space<vmem>>, vector<1x1x11xf32>
    %37 = vector.shape_cast %36 : vector<1x1x11xf32> to vector<1x11xf32>
    %38 = vector.shape_cast %35 : vector<1x11xf32> to vector<1x1x11xf32>
    tpu.vector_store %arg4[%c0_15, %c3, %c0_16], %38 {strides = array<i32>} : memref<1x8x11xf32, #tpu.memory_space<vmem>>, vector<1x1x11xf32>,
    %c4_i32 = arith.constant 4 : i32
    %39 = arith.addi %2, %c4_i32 : i32
    %40 = arith.index_cast %39 : i32 to index
    %41 = memref.load %arg2[%40] : memref<32xi32, #tpu.memory_space<smem>>
    %c0_17 = arith.constant 0 : index
    %42 = arith.index_cast %41 : i32 to index
    %c0_18 = arith.constant 0 : index
    %43 = vector.load %arg3[%c0_17, %42, %c0_18] : memref<1x256x11xf32, #tpu.memory_space<vmem>>, vector<1x1x11xf32>
    %44 = vector.shape_cast %43 : vector<1x1x11xf32> to vector<1x11xf32>
    %c0_19 = arith.constant 0 : index
    %c4 = arith.constant 4 : index
    %c0_20 = arith.constant 0 : index
    %45 = vector.load %arg4[%c0_19, %c4, %c0_20] : memref<1x8x11xf32, #tpu.memory_space<vmem>>, vector<1x1x11xf32>
    %46 = vector.shape_cast %45 : vector<1x1x11xf32> to vector<1x11xf32>
    %47 = vector.shape_cast %44 : vector<1x11xf32> to vector<1x1x11xf32>
    tpu.vector_store %arg4[%c0_19, %c4, %c0_20], %47 {strides = array<i32>} : memref<1x8x11xf32, #tpu.memory_space<vmem>>, vector<1x1x11xf32>,
    %c5_i32 = arith.constant 5 : i32
    %48 = arith.addi %2, %c5_i32 : i32
    %49 = arith.index_cast %48 : i32 to index
    %50 = memref.load %arg2[%49] : memref<32xi32, #tpu.memory_space<smem>>
    %c0_21 = arith.constant 0 : index
    %51 = arith.index_cast %50 : i32 to index
    %c0_22 = arith.constant 0 : index
    %52 = vector.load %arg3[%c0_21, %51, %c0_22] : memref<1x256x11xf32, #tpu.memory_space<vmem>>, vector<1x1x11xf32>
    %53 = vector.shape_cast %52 : vector<1x1x11xf32> to vector<1x11xf32>
    %c0_23 = arith.constant 0 : index
    %c5 = arith.constant 5 : index
    %c0_24 = arith.constant 0 : index
    %54 = vector.load %arg4[%c0_23, %c5, %c0_24] : memref<1x8x11xf32, #tpu.memory_space<vmem>>, vector<1x1x11xf32>
    %55 = vector.shape_cast %54 : vector<1x1x11xf32> to vector<1x11xf32>
    %56 = vector.shape_cast %53 : vector<1x11xf32> to vector<1x1x11xf32>
    tpu.vector_store %arg4[%c0_23, %c5, %c0_24], %56 {strides = array<i32>} : memref<1x8x11xf32, #tpu.memory_space<vmem>>, vector<1x1x11xf32>,
    %c6_i32 = arith.constant 6 : i32
    %57 = arith.addi %2, %c6_i32 : i32
    %58 = arith.index_cast %57 : i32 to index
    %59 = memref.load %arg2[%58] : memref<32xi32, #tpu.memory_space<smem>>
    %c0_25 = arith.constant 0 : index
    %60 = arith.index_cast %59 : i32 to index
    %c0_26 = arith.constant 0 : index
    %61 = vector.load %arg3[%c0_25, %60, %c0_26] : memref<1x256x11xf32, #tpu.memory_space<vmem>>, vector<1x1x11xf32>
    %62 = vector.shape_cast %61 : vector<1x1x11xf32> to vector<1x11xf32>
    %c0_27 = arith.constant 0 : index
    %c6 = arith.constant 6 : index
    %c0_28 = arith.constant 0 : index
    %63 = vector.load %arg4[%c0_27, %c6, %c0_28] : memref<1x8x11xf32, #tpu.memory_space<vmem>>, vector<1x1x11xf32>
    %64 = vector.shape_cast %63 : vector<1x1x11xf32> to vector<1x11xf32>
    %65 = vector.shape_cast %62 : vector<1x11xf32> to vector<1x1x11xf32>
    tpu.vector_store %arg4[%c0_27, %c6, %c0_28], %65 {strides = array<i32>} : memref<1x8x11xf32, #tpu.memory_space<vmem>>, vector<1x1x11xf32>,
    %c7_i32 = arith.constant 7 : i32
    %66 = arith.addi %2, %c7_i32 : i32
    %67 = arith.index_cast %66 : i32 to index
    %68 = memref.load %arg2[%67] : memref<32xi32, #tpu.memory_space<smem>>
    %c0_29 = arith.constant 0 : index
    %69 = arith.index_cast %68 : i32 to index
    %c0_30 = arith.constant 0 : index
    %70 = vector.load %arg3[%c0_29, %69, %c0_30] : memref<1x256x11xf32, #tpu.memory_space<vmem>>, vector<1x1x11xf32>
    %71 = vector.shape_cast %70 : vector<1x1x11xf32> to vector<1x11xf32>
    %c0_31 = arith.constant 0 : index
    %c7 = arith.constant 7 : index
    %c0_32 = arith.constant 0 : index
    %72 = vector.load %arg4[%c0_31, %c7, %c0_32] : memref<1x8x11xf32, #tpu.memory_space<vmem>>, vector<1x1x11xf32>
    %73 = vector.shape_cast %72 : vector<1x1x11xf32> to vector<1x11xf32>
    %74 = vector.shape_cast %71 : vector<1x11xf32> to vector<1x1x11xf32>
    tpu.vector_store %arg4[%c0_31, %c7, %c0_32], %74 {strides = array<i32>} : memref<1x8x11xf32, #tpu.memory_space<vmem>>, vector<1x1x11xf32>,
    return
  }
  func.func @transform_0(%arg0: i32, %arg1: i32, %arg2: memref<32xi32, #tpu.memory_space<smem>>) -> (i32, i32, i32) {
    %c0_i32 = arith.constant 0 : i32
    %c0_i32_0 = arith.constant 0 : i32
    %c0_i32_1 = arith.constant 0 : i32
    return %arg0, %c0_i32, %c0_i32_0 : i32, i32, i32
  }
  func.func @transform_1(%arg0: i32, %arg1: i32, %arg2: memref<32xi32, #tpu.memory_space<smem>>) -> (i32, i32, i32) {
    %c0_i32 = arith.constant 0 : i32
    %c0_i32_0 = arith.constant 0 : i32
    return %arg0, %arg1, %c0_i32 : i32, i32, i32
  }
}

</mosaic_0001>

<llo_original>
// kernel: tpu_custom_call.1
$region0: #{tpu_custom_call.1}
  #allocation0 [shape = 'u32[]', space=smem, size = 0x4, offset = 0x4, fixed_abs, tag = 'smem constant byte address 0x4 - core index']
  #allocation1 [shape = 'u32[144,128]{1,0:T(1,128)}', space=vmem, size = 0x12000, scoped, tag = 'internal scratch']
  #allocation2 [shape = 's32[1]{0}', space=sflag, size = 0x4, scoped, tag = 'scoped memory for tpu_custom_call.1']
  #allocation3 [shape = 'u8[512]{0}', space=smem, size = 0x200, scoped, tag = 'prefetched SMEM operand 0']
  %s0 = inlined_call_operand.vmem [shape: s32[32], index: 0, kind: input, shape index: {}]
  %s1 = inlined_call_operand.vmem [shape: f32[4,256,11], index: 1, kind: input, shape index: {}]
  %s2 = inlined_call_operand.hbm [shape: f32[4,8,11], index: 2, kind: output, shape index: {}]
  %s3 = sld [smem:[#allocation0]]
  $region37: #{tpu_custom_call.1} parent=0
    _
  %s5 = ssub.s32 1, %s3
  %s6 = scalar_select 0, %s5, %s3
  %s7 = sshll.u32 %s0, 4
  %s8 = int_to_ptr.vmem [resolvable:$true] %s7
  %10 = dma.vmem_to_smem %s8, 16, [#allocation3], [#allocation2]
  %11 = dma.done [#allocation2], 16
  %12 = sfence
  $region1: #{tpu_custom_call.1} parent=0
    #allocation4 [shape = 'u8[8192]{0}', space=vmem, size = 0x2000, scoped, tag = 'output window, operand 0']
    #allocation5 [shape = 's32[2]{0}', space=sflag, size = 0x8, scoped, tag = 'scoped memory for tpu_custom_call.1']
    %13 = vsyncpa [#allocation5], 0
    %s14 = scalar_lea.sflag [#allocation5], 1
    %15 = vsyncpa %s14, 0
    loop: start=0, step=1, limit=6
    $region2: #{tpu_custom_call.1} parent=1 // loop_pre_header
      _
    $region3: #{tpu_custom_call.1} parent=1 // loop_header
      %s17 = sphi 0, %s21
      %p18 = scmp.ge.s32.totalorder %s17, 6
      %s24 = sphi 0, %s36
      %s25 = sphi 0, %s32
      %s26 = sphi 0, %s24
      %s27 = sphi 0, %s25
      %s28 = sphi 0, %s26
      %s29 = sphi 0, %s27
      %s39 = sphi 0, %s41
      %s42 = sphi 0, %s39
      %s43 = sphi 0, %s42
      %s59 = sphi 0, %s43
      %s67 = sphi 0, %s69
      %s70 = sphi 0, %s67
      %s71 = sphi 0, %s70
      %s87 = sphi 0, %s71
    $region4: #{tpu_custom_call.1} parent=1 // loop_header_branch
      %20 = sbr.rel (%p18) target = $region8
    $region5: #{tpu_custom_call.1} parent=1 // loop_body
      %s22 = ssub.s32 %s17, 1
      %s23 = ssub.s32 %s17, 2
      %s30 = sadd.s32 1, %s25
      %p31 = scmp.ge.s32.totalorder %s30, 1
      %s32 = scalar_select %p31, 0, %s30
      %s33 = sadd.s32 1, %s24
      %s34 = scalar_select %p31, %s33, %s24
      %p35 = scmp.ge.s32.totalorder %s34, 4
      %s36 = scalar_select %p35, 0, %s34
      %s37 = ssub.s32 %s24, %s36
      %p38 = scmp.eq.s32.totalorder %s37, 0
      %s40 = sadd.s32 %s39, 1
      %s41 = scalar_select %p38, %s39, %s40
      %p44 = pneg %p38
      %p45 = scmp.eq.s32.totalorder %s17, 3
      %p46 = por %p44, %p45
      %p47 = scmp.ne.s32.totalorder %s39, %s42
      %p48 = scmp.eq.s32.totalorder %s17, 0
      %p49 = por %p47, %p48
      %p50 = scmp.ne.s32.totalorder %s39, %s42
      %p51 = scmp.eq.s32.totalorder %s22, 3
      %p52 = por %p50, %p51
      %p53 = scmp.ne.s32.totalorder %s42, %s43
      %p54 = scmp.eq.s32.totalorder %s22, 0
      %p55 = por %p53, %p54
      %p56 = scmp.ne.s32.totalorder %s42, %s43
      %p57 = scmp.eq.s32.totalorder %s23, 3
      %p58 = por %p56, %p57
      %p60 = scmp.ne.s32.totalorder %s43, %s59
      %p61 = scmp.eq.s32.totalorder %s23, 0
      %p62 = por %p60, %p61
      %s63 = ssub.s32 %s24, %s36
      %s64 = ssub.s32 %s25, %s32
      %s65 = sor.u32 %s63, %s64
      %p66 = scmp.eq.s32.totalorder %s65, 0
      %s68 = sadd.s32 %s67, 1
      %s69 = scalar_select %p66, %s67, %s68
      %p72 = pneg %p66
      %p73 = scmp.eq.s32.totalorder %s17, 3
      %p74 = por %p72, %p73
      %p75 = scmp.ne.s32.totalorder %s67, %s70
      %p76 = scmp.eq.s32.totalorder %s17, 0
      %p77 = por %p75, %p76
      %p78 = scmp.ne.s32.totalorder %s67, %s70
      %p79 = scmp.eq.s32.totalorder %s22, 3
      %p80 = por %p78, %p79
      %p81 = scmp.ne.s32.totalorder %s70, %s71
      %p82 = scmp.eq.s32.totalorder %s22, 0
      %p83 = por %p81, %p82
      %p84 = scmp.ne.s32.totalorder %s70, %s71
      %p85 = scmp.eq.s32.totalorder %s23, 3
      %p86 = por %p84, %p85
      %p88 = scmp.ne.s32.totalorder %s71, %s87
      %p89 = scmp.eq.s32.totalorder %s23, 0
      %p90 = por %p88, %p89
      %p91 = scmp.le.s32.totalorder 1, %s17
      %p92 = scmp.lt.s32.totalorder %s17, 5
      %p93 = pnand %p91, %p92
      %p94 = pneg %p93
      // Predicated region
      $region9: #{tpu_custom_call.1} parent=5 // pred_check
        _
      $region10: #{tpu_custom_call.1} parent=5 // pred_check_branch
        %96 = sbr.rel (%p93) target = $region12
      $region11: #{tpu_custom_call.1} parent=5 // pred_region
        %s97 = ssub.s32 %s17, 1
      $region12: #{tpu_custom_call.1} parent=5 // pred_fallthru
        _
      %p98 = scmp.lt.s32.totalorder %s17, 4
      // Predicated region
      $region13: #{tpu_custom_call.1} parent=5 // pred_check
        %p99 = pneg %p98
      $region14: #{tpu_custom_call.1} parent=5 // pred_check_branch
        %101 = sbr.rel (%p99) target = $region16
      $region15: #{tpu_custom_call.1} parent=5 // pred_region
        // Predicated region
        $region17: #{tpu_custom_call.1} parent=15 // pred_check
          %p102 = pneg %p49
        $region18: #{tpu_custom_call.1} parent=15 // pred_check_branch
          %104 = sbr.rel (%p102) target = $region20
        $region19: #{tpu_custom_call.1} parent=15 // pred_region
          %p105 = scmp.lt.s32.totalorder %s24, 3
          %s106 = scalar_select %p105, %s24, 3
          %s107 = smul.addr %s106, 32
          %s108 = smul.addr %s107, 8
          %s109 = scalar_lea.vmem %s1, %s108
        $region20: #{tpu_custom_call.1} parent=15 // pred_fallthru
          _
      $region16: #{tpu_custom_call.1} parent=5 // pred_fallthru
        _
      %p110 = scmp.le.s32.totalorder 1, %s17
      %p111 = scmp.lt.s32.totalorder %s17, 5
      %p112 = pnand %p110, %p111
      %p113 = pneg %p112
      // Predicated region
      $region21: #{tpu_custom_call.1} parent=5 // pred_check
        _
      $region22: #{tpu_custom_call.1} parent=5 // pred_check_branch
        %115 = sbr.rel (%p112) target = $region24
      $region23: #{tpu_custom_call.1} parent=5 // pred_region
        %s116 = ssub.s32 %s17, 1
        %p117 = scmp.lt.s32.totalorder %s26, 3
        %s118 = scalar_select %p117, %s26, 3
        %s119 = smul.addr %s118, 32
        %s120 = smul.addr %s119, 8
        %s121 = scalar_lea.vmem %s1, %s120
        %p122 = pneg %p55
        %p123 = pneg %p52
        %p124 = pneg %p83
        %p125 = pneg %p80
        %s126 = sand.u32 %s70, 1
        %s127 = scalar_lea.sflag [#allocation5], %s126
        %s128 = sand.u32 %s70, 1
        %s129 = smul.addr %s128, 8
        %s130 = scalar_lea.vmem [#allocation4], %s129
        %p131 = scmp.lt.s32.totalorder %s26, 3
        %s132 = scalar_select %p131, %s26, 3
        %s133 = smul.addr %s132, 32
        %s134 = smul.addr %s133, 8
        %s135 = scalar_lea.vmem %s1, %s134
        %s136 = smul.u32 %s26, 8
        %s137 = smul.u32 %s27, 8
        %s138 = sadd.s32 %s136, %s137
        %s139 = sld [smem:[#allocation3 + %s138]]
        %s140 = scalar_lea.vmem %s135, %s139
        %v141 = vld [vmem:[%s140] sm:$0x1]
        %vm142 = vcmask 81920
        %143 = vst.msk [vmem:[%s130] sm:$0x1] %vm142, %v141
        %s144 = sadd.s32 %s138, 1
        %s145 = sld [smem:[#allocation3 + %s144]]
        %s146 = scalar_lea.vmem %s135, %s145
        %v147 = vld [vmem:[%s146] sm:$0x1]
        %148 = vst.msk [vmem:[%s130 + $0x1] sm:$0x1] %vm142, %v147
        %s149 = sadd.s32 %s138, 2
        %s150 = sld [smem:[#allocation3 + %s149]]
        %s151 = scalar_lea.vmem %s135, %s150
        %v152 = vld [vmem:[%s151] sm:$0x1]
        %153 = vst.msk [vmem:[%s130 + $0x2] sm:$0x1] %vm142, %v152
        %s154 = sadd.s32 %s138, 3
        %s155 = sld [smem:[#allocation3 + %s154]]
        %s156 = scalar_lea.vmem %s135, %s155
        %v157 = vld [vmem:[%s156] sm:$0x1]
        %158 = vst.msk [vmem:[%s130 + $0x3] sm:$0x1] %vm142, %v157
        %s159 = sadd.s32 %s138, 4
        %s160 = sld [smem:[#allocation3 + %s159]]
        %s161 = scalar_lea.vmem %s135, %s160
        %v162 = vld [vmem:[%s161] sm:$0x1]
        %163 = vst.msk [vmem:[%s130 + $0x4] sm:$0x1] %vm142, %v162
        %s164 = sadd.s32 %s138, 5
        %s165 = sld [smem:[#allocation3 + %s164]]
        %s166 = scalar_lea.vmem %s135, %s165
        %v167 = vld [vmem:[%s166] sm:$0x1]
        %168 = vst.msk [vmem:[%s130 + $0x5] sm:$0x1] %vm142, %v167
        %s169 = sadd.s32 %s138, 6
        %s170 = sld [smem:[#allocation3 + %s169]]
        %s171 = scalar_lea.vmem %s135, %s170
        %v172 = vld [vmem:[%s171] sm:$0x1]
        %173 = vst.msk [vmem:[%s130 + $0x6] sm:$0x1] %vm142, %v172
        %s174 = sadd.s32 %s138, 7
        %s175 = sld [smem:[#allocation3 + %s174]]
        %s176 = scalar_lea.vmem %s135, %s175
        %v177 = vld [vmem:[%s176] sm:$0x1]
        %178 = vst.msk [vmem:[%s130 + $0x7] sm:$0x1] %vm142, %v177
        %s179 = sand.u32 %s70, 1
        %s180 = scalar_lea.sflag [#allocation5], %s179
        %s181 = sand.u32 %s70, 1
        %s182 = smul.addr %s181, 8
        %s183 = scalar_lea.vmem [#allocation4], %s182
        // Predicated region
        $region25: #{tpu_custom_call.1} parent=23 // pred_check
          %p184 = pneg %p80
        $region26: #{tpu_custom_call.1} parent=23 // pred_check_branch
          %186 = sbr.rel (%p184) target = $region28
        $region27: #{tpu_custom_call.1} parent=23 // pred_region
          %s188 = ssub.s32 128, 128
          %189 = vsyncadd %s180, %s188
          %s190 = sadd.s32 %s27, %s26
          %s191 = smul.addr %s190, 128
          %s192 = scalar_lea.hbm %s2, %s191
          %s194 = sshll.u32 %s183, 4
          %s195 = int_to_ptr.vmem [resolvable:$true] %s194
          %197 = dma.vmem_to_hbm [thread:$0]  %s195, 128, %s192, %s180
        $region28: #{tpu_custom_call.1} parent=23 // pred_fallthru
          _
      $region24: #{tpu_custom_call.1} parent=5 // pred_fallthru
        _
      %p198 = scmp.le.s32.totalorder 2, %s17
      // Predicated region
      $region29: #{tpu_custom_call.1} parent=5 // pred_check
        %p199 = pneg %p198
      $region30: #{tpu_custom_call.1} parent=5 // pred_check_branch
        %201 = sbr.rel (%p199) target = $region32
      $region31: #{tpu_custom_call.1} parent=5 // pred_region
        %s202 = ssub.s32 %s17, 2
        // Predicated region
        $region33: #{tpu_custom_call.1} parent=31 // pred_check
          %p203 = pneg %p86
        $region34: #{tpu_custom_call.1} parent=31 // pred_check_branch
          %205 = sbr.rel (%p203) target = $region36
        $region35: #{tpu_custom_call.1} parent=31 // pred_region
          %s206 = sand.u32 %s71, 1
          %s207 = scalar_lea.sflag [#allocation5], %s206
          %s208 = sand.u32 %s71, 1
          %s209 = smul.addr %s208, 8
          %s210 = scalar_lea.vmem [#allocation4], %s209
          %211 = dma.done %s207, 128
        $region36: #{tpu_custom_call.1} parent=31 // pred_fallthru
          _
      $region32: #{tpu_custom_call.1} parent=5 // pred_fallthru
        _
    $region6: #{tpu_custom_call.1} parent=1 // loop_footer
      %s21 = sadd.s32 1, %s17
    $region7: #{tpu_custom_call.1} parent=1 // loop_footer_branch
      %16 = sbr.rel target = $region3
    $region8: #{tpu_custom_call.1} parent=1 // loop_exit
      _
    %212 = vsyncpa [#allocation5], 1
    %s213 = scalar_lea.sflag [#allocation5], 1
    %214 = vsyncpa %s213, 1

</llo_original>
